<compile_context>
chip_gen: v7x
topology: tpu7x:2x2x1
jax: 0.10.0
libtpu: 0.0.40
codegen_flags: <defaults>
</compile_context>

<pallas_src>
import math
import functools

import jax
import jax.numpy as jnp
from jax import lax
from jax.experimental import pallas as pl
from jax.experimental.pallas import tpu as pltpu


def _gelu_exact(x):
    # nn.GELU() default = exact erf-based GELU
    return 0.5 * x * (1.0 + lax.erf(x * (1.0 / math.sqrt(2.0))))


def _round_up(n, m):
    return ((n + m - 1) // m) * m


# --------------------------------------------------------------------------
# Kernel
# --------------------------------------------------------------------------
def fan_kernel(x_ref, w_ref, b_ref, out_ref, *, tn, trig_width, out_pad,
               matmul_dtype):
    j = pl.program_id(1)

    xv = x_ref[...]
    if matmul_dtype is not None:
        xv = xv.astype(matmul_dtype)  # bf16 feed for the MXU; accumulate in f32
    z = jnp.dot(xv, w_ref[...], preferred_element_type=jnp.float32) + b_ref[...]

    n_sin_blocks = trig_width // tn          # pure-sin column tiles (static)
    boundary = (trig_width % tn) != 0        # one mixed tile? (static)
    gelu_start = n_sin_blocks + (1 if boundary else 0)
    n_blocks = out_pad // tn

    if n_sin_blocks > 0:
        @pl.when(j < n_sin_blocks)
        def _():
            out_ref[...] = jnp.sin(z).astype(out_ref.dtype)

    if gelu_start < n_blocks:
        @pl.when(j >= gelu_start)
        def _():
            out_ref[...] = _gelu_exact(z).astype(out_ref.dtype)

    if boundary:
        # Single tile straddling the trig/gate boundary: fall back to select.
        @pl.when(j == n_sin_blocks)
        def _():
            col = lax.broadcasted_iota(jnp.int32, z.shape, 1) + n_sin_blocks * tn
            out_ref[...] = jnp.where(col < trig_width, jnp.sin(z),
                                     _gelu_exact(z)).astype(out_ref.dtype)


# --------------------------------------------------------------------------
# Parameter fusion (call ONCE per parameter set, cache the result)
# --------------------------------------------------------------------------
def fuse_fan_params(wp, bp, wg, bg, offset, freq_scales, *, n_freqs,
                    tn=128, matmul_dtype=jnp.bfloat16):
    """wp: (Din, p_dim), bp: (p_dim,), wg: (Din, g_dim), bg: (g_dim,),
    offset: (n_freqs, p_dim), freq_scales: (n_freqs,).

    Returns (w_fused, b_fused, meta).  Hoist this out of the per-forward path.
    """
    assert tn % 128 == 0, "tn must be a multiple of 128 (lane width)"
    din, p_dim = wp.shape
    g_dim = wg.shape[1]
    trig_width = 2 * n_freqs * p_dim
    out_dim = trig_width + g_dim
    out_pad = _round_up(out_dim, tn)   # lane-dense, unmasked stores

    w_parts, b_parts = [], []
    for i in range(n_freqs):
        f = freq_scales[i]
        w_scaled = wp * f
        w_parts.append(w_scaled)                        # sin block
        w_parts.append(w_scaled)                        # cos block
        b_parts.append(bp * f + offset[i])              # sin(f*p + off)
        b_parts.append(bp * f + (math.pi - offset[i]))  # cos(f*p + pi/2 - off) == sin(f*p + pi - off)
    w_parts.append(wg)
    b_parts.append(bg)

    w_fused = jnp.concatenate(w_parts, axis=1)           # (Din, out_dim)
    b_fused = jnp.concatenate(b_parts, axis=0)           # (out_dim,)
    if out_pad != out_dim:
        w_fused = jnp.pad(w_fused, ((0, 0), (0, out_pad - out_dim)))
        b_fused = jnp.pad(b_fused, ((0, out_pad - out_dim),))
    if matmul_dtype is not None:
        w_fused = w_fused.astype(matmul_dtype)
    b_fused = b_fused.reshape(1, out_pad).astype(jnp.float32)

    meta = dict(din=din, p_dim=p_dim, g_dim=g_dim, n_freqs=n_freqs,
                trig_width=trig_width, out_dim=out_dim, out_pad=out_pad,
                tn=tn, matmul_dtype=matmul_dtype)
    return w_fused, b_fused, meta


# --------------------------------------------------------------------------
# VMEM-aware tiling
# --------------------------------------------------------------------------
def _vmem_capacity_bytes():
    try:
        info = pltpu.get_tpu_info()
        cap = getattr(info, "vmem_capacity_bytes", None)
        if cap:
            return int(cap)
    except Exception:
        pass
    return 128 * 1024 * 1024   # conservative fallback (v5e/v6e)


def _pick_batch_tile(B, din, tn, x_bytes, w_bytes, out_bytes, vmem_cap,
                     block_b=None):
    if block_b is None:
        budget = int(0.35 * vmem_cap)                      # leave compiler headroom
        fixed = 2 * (din * tn * w_bytes + tn * 4)          # W + bias double buffers
        per_row = 2 * (din * x_bytes + tn * out_bytes)     # x + out double buffers
        rows = (budget - fixed) // max(per_row, 1)
        block_b = max(8, min(1024, (rows // 8) * 8))
    # >=4 batch grid steps when the batch allows it (2 per TC on v7x megacore,
    # and >=2 pipeline steps per core); also avoids >2x padding waste.
    n_blocks = max(pl.cdiv(B, block_b), min(4, pl.cdiv(B, 8)))
    tb = _round_up(pl.cdiv(B, n_blocks), 8)
    return tb


def _ensure_compatible_input(x, in_features):
    """JAX-side (static-shape) equivalent of the torch helper: flatten >2D,
    expand single-column input, pad/truncate to in_features."""
    if x.ndim == 2 and x.shape[1] == 1 and in_features > 1:
        x = jnp.broadcast_to(x, (x.shape[0], in_features))
    elif x.ndim >= 3:
        x = x.reshape(x.shape[0], -1)
    if x.shape[1] > in_features:
        x = x[:, :in_features]
    elif x.shape[1] < in_features:
        x = jnp.pad(x, ((0, 0), (0, in_features - x.shape[1])))
    return x


# --------------------------------------------------------------------------
# Forward
# --------------------------------------------------------------------------
def fan_layer_multi_frequency(x, w_fused, b_fused, meta, *, block_b=None,
                              out_dtype=None):
    """x: (B, input_dim) (or 3D, flattened).  w_fused/b_fused/meta from
    fuse_fan_params.  Returns (B, 2*n_freqs*p_dim + g_dim).

    out_dtype=bf16 halves the dominant HBM writeback if downstream tolerates it
    (default keeps x.dtype to preserve the module's numerics)."""
    din = meta["din"]
    tn = meta["tn"]
    trig_width = meta["trig_width"]
    out_dim = meta["out_dim"]
    out_pad = meta["out_pad"]

    x = _ensure_compatible_input(x, din)
    B = x.shape[0]
    out_dtype = x.dtype if out_dtype is None else out_dtype

    x_bytes = jnp.dtype(x.dtype).itemsize
    w_bytes = jnp.dtype(w_fused.dtype).itemsize
    o_bytes = jnp.dtype(out_dtype).itemsize
    vmem_cap = _vmem_capacity_bytes()

    tb = _pick_batch_tile(B, din, tn, x_bytes, w_bytes, o_bytes, vmem_cap,
                          block_b)
    b_pad = _round_up(B, tb)
    if b_pad != B:
        x = jnp.pad(x, ((0, b_pad - B), (0, 0)))

    grid = (b_pad // tb, out_pad // tn)

    # Explicit scoped-VMEM limit with headroom (v5e default is only 16 MiB).
    est = 2 * (tb * din * x_bytes + din * tn * w_bytes + tn * 4
               + tb * tn * o_bytes)
    vmem_limit = int(min(max(2 * est + (4 << 20), 32 << 20),
                         int(0.9 * vmem_cap)))

    kernel = functools.partial(fan_kernel, tn=tn, trig_width=trig_width,
                               out_pad=out_pad,
                               matmul_dtype=meta["matmul_dtype"])

    out = pl.pallas_call(
        kernel,
        out_shape=jax.ShapeDtypeStruct((b_pad, out_pad), out_dtype),
        grid=grid,
        in_specs=[
            pl.BlockSpec((tb, din), lambda i, j: (i, 0)),   # x: resident across N steps
            pl.BlockSpec((din, tn), lambda i, j: (0, j)),   # fused W: streamed per N tile
            pl.BlockSpec((1, tn), lambda i, j: (0, j)),     # fused bias
        ],
        out_specs=pl.BlockSpec((tb, tn), lambda i, j: (i, j)),
        compiler_params=pltpu.CompilerParams(
            dimension_semantics=("parallel", "arbitrary"),  # batch axis -> megacore
            vmem_limit_bytes=vmem_limit,
        ),
    )(x, w_fused, b_fused)

    if b_pad != B or out_pad != out_dim:
        out = out[:B, :out_dim]
    return out


# --------------------------------------------------------------------------
# Pure-JAX reference (matches the torch forward exactly)
# --------------------------------------------------------------------------
def fan_layer_reference(x, wp, bp, wg, bg, offset, freq_scales, *, n_freqs):
    p = x @ wp + bp
    g = jax.nn.gelu(x @ wg + bg, approximate=False)
    parts = []
    for i in range(n_freqs):
        scaled_p = p * freq_scales[i]
        parts.append(jnp.sin(scaled_p + offset[i]))
        parts.append(jnp.cos(scaled_p + math.pi / 2.0 - offset[i]))
    parts.append(g)
    return jnp.concatenate(parts, axis=-1)


if __name__ == "__main__":
    # Module config (small, consistent with __init__ constraints).
    B, input_dim, output_dim, n_freqs = 64, 32, 32, 2
    trig_part = output_dim // 2          # 16
    p_dim = trig_part // n_freqs         # 8
    g_dim = output_dim - trig_part       # 16
    # Actual forward-pass output width (the torch code emits 1.5*output_dim).
    out_dim = 2 * n_freqs * p_dim + g_dim  # 48

    key = jax.random.PRNGKey(0)
    kx, kwp, kbp, kwg, kbg = jax.random.split(key, 5)

    # Deterministic parameter init (PyTorch-Linear-style uniform bounds).
    bound = 1.0 / math.sqrt(input_dim)
    wp = jax.random.uniform(kwp, (input_dim, p_dim), jnp.float32, -bound, bound)
    bp = jax.random.uniform(kbp, (p_dim,), jnp.float32, -bound, bound)
    wg = jax.random.uniform(kwg, (input_dim, g_dim), jnp.float32, -bound, bound)
    bg = jax.random.uniform(kbg, (g_dim,), jnp.float32, -bound, bound)
    offset = jnp.full((n_freqs, p_dim), math.pi / 4.0, dtype=jnp.float32)
    # torch.logspace(-0.5, 0.5, n_freqs) (base 10)
    freq_scales = (10.0 ** jnp.linspace(-0.5, 0.5, n_freqs)).astype(jnp.float32)

    x = jax.random.normal(kx, (B, input_dim), jnp.float32)

    ref = fan_layer_reference(x, wp, bp, wg, bg, offset, freq_scales,
                              n_freqs=n_freqs)

    # 1) f32 matmul path: verifies the phase-fold / fused-weight math exactly.
    wf32, bf32, m32 = fuse_fan_params(wp, bp, wg, bg, offset, freq_scales,
                                      n_freqs=n_freqs, matmul_dtype=None)
    out32 = jax.block_until_ready(
        fan_layer_multi_frequency(x, wf32, bf32, m32))
    assert out32.shape == (B, out_dim), out32.shape
    assert jnp.allclose(out32, ref, atol=1e-4, rtol=1e-4), \
        f"f32 path max abs err {jnp.max(jnp.abs(out32 - ref))}"

    # 2) Default (bf16 matmul inputs, f32 accumulate/output) path: tolerance is
    #    loosened to cover bf16 input quantization of x/W.
    wbf, bbf, mbf = fuse_fan_params(wp, bp, wg, bg, offset, freq_scales,
                                    n_freqs=n_freqs)
    out = jax.block_until_ready(
        fan_layer_multi_frequency(x, wbf, bbf, mbf))
    assert out.shape == (B, out_dim), out.shape
    assert jnp.allclose(out, ref, atol=5e-2, rtol=5e-2), \
        f"bf16 path max abs err {jnp.max(jnp.abs(out - ref))}"

    print("KERNEL_OK")
</pallas_src>

<mosaic_0001>
module attributes {stable_mosaic.version = 11 : i64} {
  func.func @fan_kernel(%arg0: i32, %arg1: i32, %arg2: memref<16x32xf32, #tpu.memory_space<vmem>>, %arg3: memref<32x128xf32, #tpu.memory_space<vmem>>, %arg4: memref<1x128xf32, #tpu.memory_space<vmem>>, %arg5: memref<16x128xf32, #tpu.memory_space<vmem>>) attributes {dimension_semantics = [#tpu.dimension_semantics<parallel>, #tpu.dimension_semantics<arbitrary>], iteration_bounds = array<i64: 4, 1>, scalar_prefetch = 0 : i64, scratch_operands = 0 : i64, tpu.core_type = #tpu.core_type<tc>, window_params = [{transform_indices = @transform_0, window_bounds = array<i64: 16, 32>}, {transform_indices = @transform_1, window_bounds = array<i64: 32, 128>}, {transform_indices = @transform_2, window_bounds = array<i64: 1, 128>}, {transform_indices = @transform_3, window_bounds = array<i64: 16, 128>}]} {
    %c0 = arith.constant 0 : index
    %c0_0 = arith.constant 0 : index
    %0 = vector.load %arg2[%c0, %c0_0] : memref<16x32xf32, #tpu.memory_space<vmem>>, vector<16x32xf32>
    %c0_1 = arith.constant 0 : index
    %c0_2 = arith.constant 0 : index
    %1 = vector.load %arg3[%c0_1, %c0_2] : memref<32x128xf32, #tpu.memory_space<vmem>>, vector<32x128xf32>
    %cst = arith.constant dense<0.000000e+00> : vector<16x128xf32>
    %2 = tpu.matmul %0, %1, %cst {dimension_numbers = #tpu.dot_dimension_numbers<[1], [0], [0], [1], [0, 0, 1, 1], [], []>} : vector<16x32xf32>, vector<32x128xf32>, vector<16x128xf32> -> vector<16x128xf32>
    %c0_3 = arith.constant 0 : index
    %c0_4 = arith.constant 0 : index
    %3 = vector.load %arg4[%c0_3, %c0_4] : memref<1x128xf32, #tpu.memory_space<vmem>>, vector<1x128xf32>
    %4 = vector.broadcast %3 : vector<1x128xf32> to vector<16x128xf32>
    %5 = arith.addf %2, %4 : vector<16x128xf32>
    %c0_i32 = arith.constant 0 : i32
    %6 = arith.cmpi eq, %arg1, %c0_i32 : i32
    %7 = arith.extui %6 : i1 to i32
    %c0_i32_5 = arith.constant 0 : i32
    %8 = arith.cmpi ne, %7, %c0_i32_5 : i32
    scf.if %8 {
      %9 = tpu.iota {dimensions = array<i32: 1>} : vector<16x128xi32>
      %c0_i32_6 = arith.constant 0 : i32
      %10 = vector.broadcast %c0_i32_6 : i32 to vector<16x128xi32>
      %11 = arith.addi %9, %10 : vector<16x128xi32>
      %c32_i32 = arith.constant 32 : i32
      %12 = vector.broadcast %c32_i32 : i32 to vector<16x128xi32>
      %13 = arith.cmpi slt, %11, %12 : vector<16x128xi32>
      %14 = math.sin %5 : vector<16x128xf32>
      %cst_7 = arith.constant 5.000000e-01 : f32
      %15 = vector.broadcast %cst_7 : f32 to vector<16x128xf32>
      %16 = arith.mulf %15, %5 : vector<16x128xf32>
      %cst_8 = arith.constant 0.707106769 : f32
      %17 = vector.broadcast %cst_8 : f32 to vector<16x128xf32>
      %18 = arith.mulf %5, %17 : vector<16x128xf32>
      %19 = math.erf %18 : vector<16x128xf32>
      %cst_9 = arith.constant 1.000000e+00 : f32
      %20 = vector.broadcast %cst_9 : f32 to vector<16x128xf32>
      %21 = arith.addf %20, %19 : vector<16x128xf32>
      %22 = arith.mulf %16, %21 : vector<16x128xf32>
      %23 = arith.select %13, %14, %22 : vector<16x128xi1>, vector<16x128xf32>
      %c0_10 = arith.constant 0 : index
      %c0_11 = arith.constant 0 : index
      %24 = vector.load %arg5[%c0_10, %c0_11] : memref<16x128xf32, #tpu.memory_space<vmem>>, vector<16x128xf32>
      tpu.vector_store %arg5[%c0_10, %c0_11], %23 {strides = array<i32>} : memref<16x128xf32, #tpu.memory_space<vmem>>, vector<16x128xf32>,
    } else {
    }
    return
  }
  func.func @transform_0(%arg0: i32, %arg1: i32) -> (i32, i32) {
    %c0_i32 = arith.constant 0 : i32
    %c0_i32_0 = arith.constant 0 : i32
    return %arg0, %c0_i32 : i32, i32
  }
  func.func @transform_1(%arg0: i32, %arg1: i32) -> (i32, i32) {
    %c0_i32 = arith.constant 0 : i32
    %c0_i32_0 = arith.constant 0 : i32
    return %c0_i32, %arg1 : i32, i32
  }
  func.func @transform_2(%arg0: i32, %arg1: i32) -> (i32, i32) {
    %c0_i32 = arith.constant 0 : i32
    %c0_i32_0 = arith.constant 0 : i32
    return %c0_i32, %arg1 : i32, i32
  }
  func.func @transform_3(%arg0: i32, %arg1: i32) -> (i32, i32) {
    %c0_i32 = arith.constant 0 : i32
    return %arg0, %arg1 : i32, i32
  }
}

</mosaic_0001>

<llo_original>
// kernel: tpu_custom_call.1
$region0: #{tpu_custom_call.1}
  #allocation0 [shape = 'u32[]', space=smem, size = 0x4, offset = 0x4, fixed_abs, tag = 'smem constant byte address 0x4 - core index']
  #allocation1 [shape = 'u32[144,128]{1,0:T(1,128)}', space=vmem, size = 0x12000, scoped, tag = 'internal scratch']
  %s0 = inlined_call_operand.vmem [shape: f32[64,32], index: 0, kind: input, shape index: {}]
  %s1 = inlined_call_operand.vmem [shape: f32[32,128], index: 1, kind: input, shape index: {}]
  %s2 = inlined_call_operand.vmem [shape: f32[1,128], index: 2, kind: input, shape index: {}]
  %s3 = inlined_call_operand.hbm [shape: f32[64,128], index: 3, kind: output, shape index: {}]
  %s4 = sld [smem:[#allocation0]]
  $region49: #{tpu_custom_call.1} parent=0
    _
  %s6 = ssub.s32 1, %s4
  %s7 = scalar_select 0, %s6, %s4
  $region1: #{tpu_custom_call.1} parent=0
    #allocation2 [shape = 'u8[16384]{0}', space=vmem, size = 0x4000, scoped, tag = 'output window, operand 0']
    #allocation3 [shape = 's32[2]{0}', space=sflag, size = 0x8, scoped, tag = 'scoped memory for tpu_custom_call.1']
    %8 = vsyncpa [#allocation3], 0
    %s9 = scalar_lea.sflag [#allocation3], 1
    %10 = vsyncpa %s9, 0
    loop: start=0, step=1, limit=6
    $region2: #{tpu_custom_call.1} parent=1 // loop_pre_header
      _
    $region3: #{tpu_custom_call.1} parent=1 // loop_header
      %s12 = sphi 0, %s16
      %p13 = scmp.ge.s32.totalorder %s12, 6
      %s19 = sphi 0, %s31
      %s20 = sphi 0, %s27
      %s21 = sphi 0, %s19
      %s22 = sphi 0, %s20
      %s23 = sphi 0, %s21
      %s24 = sphi 0, %s22
      %s34 = sphi 0, %s36
      %s37 = sphi 0, %s34
      %s38 = sphi 0, %s37
      %s54 = sphi 0, %s38
      %s60 = sphi 0, %s62
      %s63 = sphi 0, %s60
      %s64 = sphi 0, %s63
      %s80 = sphi 0, %s64
      %s86 = sphi 0, %s88
      %s89 = sphi 0, %s86
      %s90 = sphi 0, %s89
      %s106 = sphi 0, %s90
      %s114 = sphi 0, %s116
      %s117 = sphi 0, %s114
      %s118 = sphi 0, %s117
      %s134 = sphi 0, %s118
    $region4: #{tpu_custom_call.1} parent=1 // loop_header_branch
      %15 = sbr.rel (%p13) target = $region8
    $region5: #{tpu_custom_call.1} parent=1 // loop_body
      %s17 = ssub.s32 %s12, 1
      %s18 = ssub.s32 %s12, 2
      %s25 = sadd.s32 1, %s20
      %p26 = scmp.ge.s32.totalorder %s25, 1
      %s27 = scalar_select %p26, 0, %s25
      %s28 = sadd.s32 1, %s19
      %s29 = scalar_select %p26, %s28, %s19
      %p30 = scmp.ge.s32.totalorder %s29, 4
      %s31 = scalar_select %p30, 0, %s29
      %s32 = ssub.s32 %s19, %s31
      %p33 = scmp.eq.s32.totalorder %s32, 0
      %s35 = sadd.s32 %s34, 1
      %s36 = scalar_select %p33, %s34, %s35
      %p39 = pneg %p33
      %p40 = scmp.eq.s32.totalorder %s12, 3
      %p41 = por %p39, %p40
      %p42 = scmp.ne.s32.totalorder %s34, %s37
      %p43 = scmp.eq.s32.totalorder %s12, 0
      %p44 = por %p42, %p43
      %p45 = scmp.ne.s32.totalorder %s34, %s37
      %p46 = scmp.eq.s32.totalorder %s17, 3
      %p47 = por %p45, %p46
      %p48 = scmp.ne.s32.totalorder %s37, %s38
      %p49 = scmp.eq.s32.totalorder %s17, 0
      %p50 = por %p48, %p49
      %p51 = scmp.ne.s32.totalorder %s37, %s38
      %p52 = scmp.eq.s32.totalorder %s18, 3
      %p53 = por %p51, %p52
      %p55 = scmp.ne.s32.totalorder %s38, %s54
      %p56 = scmp.eq.s32.totalorder %s18, 0
      %p57 = por %p55, %p56
      %s58 = ssub.s32 %s20, %s27
      %p59 = scmp.eq.s32.totalorder %s58, 0
      %s61 = sadd.s32 %s60, 1
      %s62 = scalar_select %p59, %s60, %s61
      %p65 = pneg %p59
      %p66 = scmp.eq.s32.totalorder %s12, 3
      %p67 = por %p65, %p66
      %p68 = scmp.ne.s32.totalorder %s60, %s63
      %p69 = scmp.eq.s32.totalorder %s12, 0
      %p70 = por %p68, %p69
      %p71 = scmp.ne.s32.totalorder %s60, %s63
      %p72 = scmp.eq.s32.totalorder %s17, 3
      %p73 = por %p71, %p72
      %p74 = scmp.ne.s32.totalorder %s63, %s64
      %p75 = scmp.eq.s32.totalorder %s17, 0
      %p76 = por %p74, %p75
      %p77 = scmp.ne.s32.totalorder %s63, %s64
      %p78 = scmp.eq.s32.totalorder %s18, 3
      %p79 = por %p77, %p78
      %p81 = scmp.ne.s32.totalorder %s64, %s80
      %p82 = scmp.eq.s32.totalorder %s18, 0
      %p83 = por %p81, %p82
      %s84 = ssub.s32 %s20, %s27
      %p85 = scmp.eq.s32.totalorder %s84, 0
      %s87 = sadd.s32 %s86, 1
      %s88 = scalar_select %p85, %s86, %s87
      %p91 = pneg %p85
      %p92 = scmp.eq.s32.totalorder %s12, 3
      %p93 = por %p91, %p92
      %p94 = scmp.ne.s32.totalorder %s86, %s89
      %p95 = scmp.eq.s32.totalorder %s12, 0
      %p96 = por %p94, %p95
      %p97 = scmp.ne.s32.totalorder %s86, %s89
      %p98 = scmp.eq.s32.totalorder %s17, 3
      %p99 = por %p97, %p98
      %p100 = scmp.ne.s32.totalorder %s89, %s90
      %p101 = scmp.eq.s32.totalorder %s17, 0
      %p102 = por %p100, %p101
      %p103 = scmp.ne.s32.totalorder %s89, %s90
      %p104 = scmp.eq.s32.totalorder %s18, 3
      %p105 = por %p103, %p104
      %p107 = scmp.ne.s32.totalorder %s90, %s106
      %p108 = scmp.eq.s32.totalorder %s18, 0
      %p109 = por %p107, %p108
      %s110 = ssub.s32 %s19, %s31
      %s111 = ssub.s32 %s20, %s27
      %s112 = sor.u32 %s110, %s111
      %p113 = scmp.eq.s32.totalorder %s112, 0
      %s115 = sadd.s32 %s114, 1
      %s116 = scalar_select %p113, %s114, %s115
      %p119 = pneg %p113
      %p120 = scmp.eq.s32.totalorder %s12, 3
      %p121 = por %p119, %p120
      %p122 = scmp.ne.s32.totalorder %s114, %s117
      %p123 = scmp.eq.s32.totalorder %s12, 0
      %p124 = por %p122, %p123
      %p125 = scmp.ne.s32.totalorder %s114, %s117
      %p126 = scmp.eq.s32.totalorder %s17, 3
      %p127 = por %p125, %p126
      %p128 = scmp.ne.s32.totalorder %s117, %s118
      %p129 = scmp.eq.s32.totalorder %s17, 0
      %p130 = por %p128, %p129
      %p131 = scmp.ne.s32.totalorder %s117, %s118
      %p132 = scmp.eq.s32.totalorder %s18, 3
      %p133 = por %p131, %p132
      %p135 = scmp.ne.s32.totalorder %s118, %s134
      %p136 = scmp.eq.s32.totalorder %s18, 0
      %p137 = por %p135, %p136
      %p138 = scmp.le.s32.totalorder 1, %s12
      %p139 = scmp.lt.s32.totalorder %s12, 5
      %p140 = pnand %p138, %p139
      %p141 = pneg %p140
      // Predicated region
      $region9: #{tpu_custom_call.1} parent=5 // pred_check
        _
      $region10: #{tpu_custom_call.1} parent=5 // pred_check_branch
        %143 = sbr.rel (%p140) target = $region12
      $region11: #{tpu_custom_call.1} parent=5 // pred_region
        %s144 = ssub.s32 %s12, 1
        // Predicated region
        $region13: #{tpu_custom_call.1} parent=11 // pred_check
          %p145 = pneg %p76
        $region14: #{tpu_custom_call.1} parent=11 // pred_check_branch
          %147 = sbr.rel (%p145) target = $region16
        $region15: #{tpu_custom_call.1} parent=11 // pred_region
          %p148 = scmp.lt.s32.totalorder %s22, 0
          %s149 = scalar_select %p148, %s22, 0
          %s150 = smul.addr %s149, 8
          %s151 = scalar_lea.vmem %s1, %s150
        $region16: #{tpu_custom_call.1} parent=11 // pred_fallthru
          _
        // Predicated region
        $region17: #{tpu_custom_call.1} parent=11 // pred_check
          %p152 = pneg %p102
        $region18: #{tpu_custom_call.1} parent=11 // pred_check_branch
          %154 = sbr.rel (%p152) target = $region20
        $region19: #{tpu_custom_call.1} parent=11 // pred_region
          %p155 = scmp.lt.s32.totalorder %s22, 0
          %s156 = scalar_select %p155, %s22, 0
          %s157 = scalar_lea.vmem %s2, %s156
        $region20: #{tpu_custom_call.1} parent=11 // pred_fallthru
          _
      $region12: #{tpu_custom_call.1} parent=5 // pred_fallthru
        _
      %p158 = scmp.lt.s32.totalorder %s12, 4
      // Predicated region
      $region21: #{tpu_custom_call.1} parent=5 // pred_check
        %p159 = pneg %p158
      $region22: #{tpu_custom_call.1} parent=5 // pred_check_branch
        %161 = sbr.rel (%p159) target = $region24
      $region23: #{tpu_custom_call.1} parent=5 // pred_region
        // Predicated region
        $region25: #{tpu_custom_call.1} parent=23 // pred_check
          %p162 = pneg %p44
        $region26: #{tpu_custom_call.1} parent=23 // pred_check_branch
          %164 = sbr.rel (%p162) target = $region28
        $region27: #{tpu_custom_call.1} parent=23 // pred_region
          %s165 = smul.u32 2, %s19
          %p166 = scmp.lt.s32.totalorder %s165, 7
          %s167 = scalar_select %p166, %s165, 7
          %s168 = smul.addr %s167, 8
          %s169 = scalar_lea.vmem %s0, %s168
          %s170 = smul.u32 2, %s19
        $region28: #{tpu_custom_call.1} parent=23 // pred_fallthru
          _
      $region24: #{tpu_custom_call.1} parent=5 // pred_fallthru
        _
      %p171 = scmp.le.s32.totalorder 1, %s12
      %p172 = scmp.lt.s32.totalorder %s12, 5
      %p173 = pnand %p171, %p172
      %p174 = pneg %p173
      // Predicated region
      $region29: #{tpu_custom_call.1} parent=5 // pred_check
        _
      $region30: #{tpu_custom_call.1} parent=5 // pred_check_branch
        %176 = sbr.rel (%p173) target = $region32
      $region31: #{tpu_custom_call.1} parent=5 // pred_region
        %s177 = ssub.s32 %s12, 1
        %s178 = smul.u32 2, %s21
        %p179 = scmp.lt.s32.totalorder %s178, 7
        %s180 = scalar_select %p179, %s178, 7
        %s181 = smul.addr %s180, 8
        %s182 = scalar_lea.vmem %s0, %s181
        %p183 = pneg %p50
        %p184 = pneg %p47
        %p185 = scmp.lt.s32.totalorder %s22, 0
        %s186 = scalar_select %p185, %s22, 0
        %s187 = smul.addr %s186, 8
        %s188 = scalar_lea.vmem %s1, %s187
        %p189 = pneg %p76
        %p190 = pneg %p73
        %p191 = scmp.lt.s32.totalorder %s22, 0
        %s192 = scalar_select %p191, %s22, 0
        %s193 = scalar_lea.vmem %s2, %s192
        %p194 = pneg %p102
        %p195 = pneg %p99
        %p196 = pneg %p130
        %p197 = pneg %p127
        %s198 = sand.u32 %s117, 1
        %s199 = scalar_lea.sflag [#allocation3], %s198
        %s200 = sand.u32 %s117, 1
        %s201 = smul.addr %s200, 16
        %s202 = scalar_lea.vmem [#allocation2], %s201
        %s203 = smul.u32 2, %s21
        %p204 = scmp.lt.s32.totalorder %s203, 7
        %s205 = scalar_select %p204, %s203, 7
        %s206 = smul.addr %s205, 8
        %s207 = scalar_lea.vmem %s0, %s206
        %s208 = smul.u32 2, %s21
        %p209 = scmp.lt.s32.totalorder %s22, 0
        %s210 = scalar_select %p209, %s22, 0
        %s211 = smul.addr %s210, 8
        %s212 = scalar_lea.vmem %s1, %s211
        %p213 = scmp.lt.s32.totalorder %s22, 0
        %s214 = scalar_select %p213, %s22, 0
        %s215 = scalar_lea.vmem %s2, %s214
        %s216 = smul.u32 2, %s21
        %v217 = vld [vmem:[%s207] sm:$0xff]
        %v218 = vld [vmem:[%s207 + $0x8] sm:$0xff]
        %v219 = vld [vmem:[%s212] sm:$0xff]
        %v220 = vld [vmem:[%s212 + $0x8] sm:$0xff]
        %v221 = vld [vmem:[%s212 + $0x10] sm:$0xff]
        %v222 = vld [vmem:[%s212 + $0x18] sm:$0xff]
        %v223 = vld [vmem:[%s215] sm:$0x1]
        %v225 = vlaneseq
        %v226 = vshrl.u32 %v225, 7
        %v227 = vsub.s32 0, %v226
        %v228 = vrot.slane %v223, %v227
        %vm230 = vcmask 261120
        %v232 = vsel %vm230, %v217, 0
        %v235 = vsel %vm230, %v218, 0
        %237 = vmatprep.subr.mxu0 0.0
        %238 = vmatpush1.msra.mxu0 %v219
        %239 = vmatprep.subr.mxu0 0.0
        %240 = vmatpush1.msra.mxu0 %v220
        %241 = vmatprep.subr.mxu0 0.0
        %242 = vmatpush1.msra.mxu0 %v221
        %243 = vmatprep.subr.mxu0 0.0
        %244 = vmatpush1.msra.mxu0 %v222
        %245 = vmatprep.subr.mxu0 0.0
        %246 = vmatpush1.msra.mxu0 0.0
        %247 = vmatprep.subr.mxu0 0.0
        %248 = vmatpush1.msra.mxu0 0.0
        %249 = vmatprep.subr.mxu0 0.0
        %250 = vmatpush1.msra.mxu0 0.0
        %251 = vmatprep.subr.mxu0 0.0
        %252 = vmatpush1.msra.mxu0 0.0
        %253 = vmatprep.subr.mxu0 0.0
        %254 = vmatpush1.msra.mxu0 0.0
        %255 = vmatprep.subr.mxu0 0.0
        %256 = vmatpush1.msra.mxu0 0.0
        %257 = vmatprep.subr.mxu0 0.0
        %258 = vmatpush1.msra.mxu0 0.0
        %259 = vmatprep.subr.mxu0 0.0
        %260 = vmatpush1.msra.mxu0 0.0
        %261 = vmatprep.subr.mxu0 0.0
        %262 = vmatpush1.msra.mxu0 0.0
        %263 = vmatprep.subr.mxu0 0.0
        %264 = vmatpush1.msra.mxu0 0.0
        %265 = vmatprep.subr.mxu0 0.0
        %266 = vmatpush1.msra.mxu0 0.0
        %267 = vmatprep.subr.mxu0 0.0
        %268 = vmatpush1.msra.mxu0 0.0
        %269 = vmatprep.subr.mxu0 0.0
        %270 = vmatpush1.msra.mxu0 0.0
        %271 = vmatprep.subr.mxu0 0.0
        %272 = vmatpush1.msra.mxu0 0.0
        %273 = vmatprep.subr.mxu0 0.0
        %274 = vmatpush1.msra.mxu0 0.0
        %275 = vmatprep.subr.mxu0 0.0
        %276 = vmatpush1.msra.mxu0 0.0
        %277 = vmatprep.subr.mxu0 0.0
        %278 = vmatpush1.msra.mxu0 0.0
        %279 = vmatprep.subr.mxu0 0.0
        %280 = vmatpush1.msra.mxu0 0.0
        %281 = vmatprep.subr.mxu0 0.0
        %282 = vmatpush1.msra.mxu0 0.0
        %283 = vmatprep.subr.mxu0 0.0
        %284 = vmatpush1.msra.mxu0 0.0
        %285 = vmatprep.subr.mxu0 0.0
        %286 = vmatpush1.msra.mxu0 0.0
        %287 = vmatprep.subr.mxu0 0.0
        %288 = vmatpush1.msra.mxu0 0.0
        %289 = vmatprep.subr.mxu0 0.0
        %290 = vmatpush1.msra.mxu0 0.0
        %291 = vmatprep.subr.mxu0 0.0
        %292 = vmatpush1.msra.mxu0 0.0
        %293 = vmatprep.subr.mxu0 0.0
        %294 = vmatpush1.msra.mxu0 0.0
        %295 = vmatprep.subr.mxu0 0.0
        %296 = vmatpush1.msra.mxu0 0.0
        %297 = vmatprep.subr.mxu0 0.0
        %298 = vmatpush1.msra.mxu0 0.0
        %299 = vmatprep.subr.mxu0 0.0
        %300 = vmatpush1.msra.mxu0 0.0
        %301 = vmatprep.mubr.f32.mxu0 0.0
        %302 = vmatmul.mubr.f32.gmra.mrb[0].mxu0 %v232
        %v303 = vpop.f32.mrb[0].mxu0
        %v304 = vadd.f32 %v228, %v303
        %v305 = vpop.f32.mrb[0].mxu0
        %306 = vmatprep.mubr.f32.mxu0 0.0
        %307 = vmatmul.mubr.f32.gmra.mrb[0].mxu0 %v235
        %v308 = vpop.f32.mrb[0].mxu0
        %v309 = vadd.f32 %v228, %v308
        %v310 = vpop.f32.mrb[0].mxu0
        %311 = vdwg.mxu0
        %p312 = scmp.eq.s32.totalorder %s22, 0
        // Predicated region
        $region33: #{tpu_custom_call.1} parent=31 // pred_check
          %p313 = pneg %p312
        $region34: #{tpu_custom_call.1} parent=31 // pred_check_branch
          %315 = sbr.rel (%p313) target = $region36
        $region35: #{tpu_custom_call.1} parent=31 // pred_region
          %v316 = vlaneseq
          %v317 = vand.u32 %v316, 127
          %vm318 = vcmp.lt.s32.totalorder %v317, 32
          %v319 = vand.u32 2147483647, %v304
          %vm320 = vcmp.le.f32.partialorder %v319, 0.7853982
          %vm321 = vcmp.lt.s32.totalorder %v304, 0
          %v322 = vand.u32 %v304, 2139095040
          %v323 = vshrl.u32 %v322, 23
          %v324 = vsub.s32 %v323, 127
          %v325 = vand.u32 2147483647, %v304
          %v326 = vand.u32 %v325, 8388607
          %v327 = vor.u32 %v326, 8388608
          %v328 = vsub.s32 0, %v327
          %v329 = vadd.s32 %v324, 1
          %vm330 = vcmp.gt.s32.totalorder %v329, 0
          %v331 = vsel %vm330, %v329, 0
          %v332 = vshrl.u32 %v331, 5
          %v333 = vand.u32 %v331, 31
          %v334 = vsub.s32 32, %v333
          %v335 = vshrl.u32 683565275, %v334
          %v336 = vshll.u32 683565275, %v333
          %v337 = vshrl.u32 2475754826, %v334
          %v338 = vor.u32 %v336, %v337
          %v339 = vshll.u32 2475754826, %v333
          %v340 = vshrl.u32 2131351028, %v334
          %v341 = vor.u32 %v339, %v340
          %v342 = vshll.u32 2131351028, %v333
          %v343 = vshrl.u32 2102212464, %v334
          %v344 = vor.u32 %v342, %v343
          %v345 = vshll.u32 2102212464, %v333
          %v346 = vshrl.u32 920167782, %v334
          %v347 = vor.u32 %v345, %v346
          %v348 = vshll.u32 920167782, %v333
          %v349 = vshrl.u32 1326507024, %v334
          %v350 = vor.u32 %v348, %v349
          %vm351 = vcmp.lt.s32.totalorder %v332, 1
          %vm352 = vcmp.lt.s32.totalorder %v332, 2
          %vm353 = vcmp.lt.s32.totalorder %v332, 3
          %vm354 = vcmp.lt.s32.totalorder %v332, 4
          %v355 = vsel %vm351, %v335, %v338
          %v356 = vsel %vm354, %v344, 2102212464
          %v357 = vsel %vm353, %v341, %v356
          %v358 = vsel %vm352, %v355, %v357
          %v359 = vsel %vm351, %v338, %v341
          %v360 = vsel %vm354, %v347, 920167782
          %v361 = vsel %vm353, %v344, %v360
          %v362 = vsel %vm352, %v359, %v361
          %v363 = vsel %vm351, %v341, %v344
          %v364 = vsel %vm354, %v350, 1326507024
          %v365 = vsel %vm353, %v347, %v364
          %v366 = vsel %vm352, %v363, %v365
          %v367 = vshll.u32 %v327, 8
          %v368 = vmul.u32.u64.compose %v367, %v366
          %v369 = vextract.low.u32 %v368
          %v370 = vextract.high.u32 %v368
          %v371 = vmul.u32.u64.compose %v367, %v362
          %v372 = vextract.low.u32 %v371
          %v373 = vextract.high.u32 %v371
          %v374 = vmul.u32 %v367, %v358
          %v375 = vadd.s32 %v370, %v372
          %vm376 = vc.u32 %v370, %v372
          %v377 = vadd.s32 %v373, 1
          %v378 = vsel %vm376, %v377, %v373
          %v379 = vadd.s32 %v374, %v378
          %v380 = vadd.s32 %v379, 536870912
          %v381 = vshrl.u32 %v380, 30
          %v382 = vshll.u32 %v381, 30
          %v383 = vsub.s32 %v379, %v382
          %vm384 = vcmp.lt.s32.totalorder %v383, 0
          %v385 = vsub.s32 0, %v383
          %v386 = vsel %vm384, %v385, %v383
          %v387 = vclz %v386
          %v388 = vsub.s32 %v387, 2
          %vm389 = vcmp.gt.s32.totalorder 0, %v388
          %v390 = vsel %vm389, 0, %v388
          %v391 = vsub.s32 32, %v390
          %v392 = vshll.u32 %v383, %v390
          %v393 = vshrl.u32 %v375, %v391
          %v394 = vor.u32 %v392, %v393
          %v395 = vsub.s32 4294967266, %v390
          %v396 = vadd.s32 %v395, 127
          %v397 = vshll.u32 %v396, 23
          %v398 = vor.u32 4788187, %v397
          %v399 = vand.u32 2147483647, %v398
          %v401 = vcvt.s32.f32 %v394
          %v402 = vmul.f32 %v401, %v399
          %v403 = vxor.u32 %v402, 2147483648
          %v404 = vsel %vm321, %v403, %v402
          %v405 = vsub.s32 4, %v381
          %v406 = vsel %vm321, %v405, %v381
          %v407 = vsel %vm320, %v304, %v404
          %v408 = vsel %vm320, 0, %v406
          %v409 = vcosq.f32.pop %v407
          %v410 = vsinq.f32.pop %v407
          %vm411 = vweird.f32 %v304
          %v412 = vadd.s32 %v408, 3
          %v413 = vand.u32 %v412, 3
          %vm414 = vcmp.lt.s32.totalorder %v413, 2
          %vm415 = vcmp.eq.s32.totalorder %v413, 0
          %v416 = vxor.u32 %v410, 2147483648
          %v417 = vsel %vm415, %v409, %v416
          %vm418 = vcmp.eq.s32.totalorder %v413, 2
          %v419 = vxor.u32 %v409, 2147483648
          %v420 = vsel %vm418, %v419, %v410
          %v421 = vsel %vm414, %v417, %v420
          %v422 = vsel %vm411, nan, %v421
          %v423 = vand.u32 2147483647, %v309
          %vm424 = vcmp.le.f32.partialorder %v423, 0.7853982
          %vm425 = vcmp.lt.s32.totalorder %v309, 0
          %v426 = vand.u32 %v309, 2139095040
          %v427 = vshrl.u32 %v426, 23
          %v428 = vsub.s32 %v427, 127
          %v429 = vand.u32 2147483647, %v309
          %v430 = vand.u32 %v429, 8388607
          %v431 = vor.u32 %v430, 8388608
          %v432 = vsub.s32 0, %v431
          %v433 = vadd.s32 %v428, 1
          %vm434 = vcmp.gt.s32.totalorder %v433, 0
          %v435 = vsel %vm434, %v433, 0
          %v436 = vshrl.u32 %v435, 5
          %v437 = vand.u32 %v435, 31
          %v438 = vsub.s32 32, %v437
          %v439 = vshrl.u32 683565275, %v438
          %v440 = vshll.u32 683565275, %v437
          %v441 = vshrl.u32 2475754826, %v438
          %v442 = vor.u32 %v440, %v441
          %v443 = vshll.u32 2475754826, %v437
          %v444 = vshrl.u32 2131351028, %v438
          %v445 = vor.u32 %v443, %v444
          %v446 = vshll.u32 2131351028, %v437
          %v447 = vshrl.u32 2102212464, %v438
          %v448 = vor.u32 %v446, %v447
          %v449 = vshll.u32 2102212464, %v437
          %v450 = vshrl.u32 920167782, %v438
          %v451 = vor.u32 %v449, %v450
          %v452 = vshll.u32 920167782, %v437
          %v453 = vshrl.u32 1326507024, %v438
          %v454 = vor.u32 %v452, %v453
          %vm455 = vcmp.lt.s32.totalorder %v436, 1
          %vm456 = vcmp.lt.s32.totalorder %v436, 2
          %vm457 = vcmp.lt.s32.totalorder %v436, 3
          %vm458 = vcmp.lt.s32.totalorder %v436, 4
          %v459 = vsel %vm455, %v439, %v442
          %v460 = vsel %vm458, %v448, 2102212464
          %v461 = vsel %vm457, %v445, %v460
          %v462 = vsel %vm456, %v459, %v461
          %v463 = vsel %vm455, %v442, %v445
          %v464 = vsel %vm458, %v451, 920167782
          %v465 = vsel %vm457, %v448, %v464
          %v466 = vsel %vm456, %v463, %v465
          %v467 = vsel %vm455, %v445, %v448
          %v468 = vsel %vm458, %v454, 1326507024
          %v469 = vsel %vm457, %v451, %v468
          %v470 = vsel %vm456, %v467, %v469
          %v471 = vshll.u32 %v431, 8
          %v472 = vmul.u32.u64.compose %v471, %v470
          %v473 = vextract.low.u32 %v472
          %v474 = vextract.high.u32 %v472
          %v475 = vmul.u32.u64.compose %v471, %v466
          %v476 = vextract.low.u32 %v475
          %v477 = vextract.high.u32 %v475
          %v478 = vmul.u32 %v471, %v462
          %v479 = vadd.s32 %v474, %v476
          %vm480 = vc.u32 %v474, %v476
          %v481 = vadd.s32 %v477, 1
          %v482 = vsel %vm480, %v481, %v477
          %v483 = vadd.s32 %v478, %v482
          %v484 = vadd.s32 %v483, 536870912
          %v485 = vshrl.u32 %v484, 30
          %v486 = vshll.u32 %v485, 30
          %v487 = vsub.s32 %v483, %v486
          %vm488 = vcmp.lt.s32.totalorder %v487, 0
          %v489 = vsub.s32 0, %v487
          %v490 = vsel %vm488, %v489, %v487
          %v491 = vclz %v490
          %v492 = vsub.s32 %v491, 2
          %vm493 = vcmp.gt.s32.totalorder 0, %v492
          %v494 = vsel %vm493, 0, %v492
          %v495 = vsub.s32 32, %v494
          %v496 = vshll.u32 %v487, %v494
          %v497 = vshrl.u32 %v479, %v495
          %v498 = vor.u32 %v496, %v497
          %v499 = vsub.s32 4294967266, %v494
          %v500 = vadd.s32 %v499, 127
          %v501 = vshll.u32 %v500, 23
          %v502 = vor.u32 4788187, %v501
          %v503 = vand.u32 2147483647, %v502
          %v505 = vcvt.s32.f32 %v498
          %v506 = vmul.f32 %v505, %v503
          %v507 = vxor.u32 %v506, 2147483648
          %v508 = vsel %vm425, %v507, %v506
          %v509 = vsub.s32 4, %v485
          %v510 = vsel %vm425, %v509, %v485
          %v511 = vsel %vm424, %v309, %v508
          %v512 = vsel %vm424, 0, %v510
          %v513 = vcosq.f32.pop %v511
          %v514 = vsinq.f32.pop %v511
          %vm515 = vweird.f32 %v309
          %v516 = vadd.s32 %v512, 3
          %v517 = vand.u32 %v516, 3
          %vm518 = vcmp.lt.s32.totalorder %v517, 2
          %vm519 = vcmp.eq.s32.totalorder %v517, 0
          %v520 = vxor.u32 %v514, 2147483648
          %v521 = vsel %vm519, %v513, %v520
          %vm522 = vcmp.eq.s32.totalorder %v517, 2
          %v523 = vxor.u32 %v513, 2147483648
          %v524 = vsel %vm522, %v523, %v514
          %v525 = vsel %vm518, %v521, %v524
          %v526 = vsel %vm515, nan, %v525
          %v527 = vmul.f32 %v304, 0.5
          %v528 = vmul.f32 %v309, 0.5
          %v529 = vmul.f32 %v304, 0.70710677
          %v530 = vmul.f32 %v309, 0.70710677
          %v531 = verf.f32.pop %v529
          %v532 = verf.f32.pop %v530
          %v533 = vadd.f32 %v531, 1.0
          %v534 = vadd.f32 %v532, 1.0
          %v535 = vmul.f32 %v527, %v533
          %v536 = vmul.f32 %v528, %v534
          %v537 = vsel %vm318, %v422, %v535
          %v538 = vsel %vm318, %v526, %v536
          %539 = vst [vmem:[%s202] sm:$0xff] %v537
          %540 = vst [vmem:[%s202 + $0x8] sm:$0xff] %v538
        $region36: #{tpu_custom_call.1} parent=31 // pred_fallthru
          _
        %s541 = sand.u32 %s117, 1
        %s542 = scalar_lea.sflag [#allocation3], %s541
        %s543 = sand.u32 %s117, 1
        %s544 = smul.addr %s543, 16
        %s545 = scalar_lea.vmem [#allocation2], %s544
        // Predicated region
        $region37: #{tpu_custom_call.1} parent=31 // pred_check
          %p546 = pneg %p127
        $region38: #{tpu_custom_call.1} parent=31 // pred_check_branch
          %548 = sbr.rel (%p546) target = $region40
        $region39: #{tpu_custom_call.1} parent=31 // pred_region
          %s549 = smul.u32 2, %s21
          %s551 = ssub.s32 256, 256
          %552 = vsyncadd %s542, %s551
          %s553 = sadd.s32 %s22, %s549
          %s554 = smul.addr %s553, 128
          %s555 = scalar_lea.hbm %s3, %s554
          %s556 = sshll.u32 %s545, 4
          %s557 = int_to_ptr.vmem [resolvable:$true] %s556
          %562 = dma.vmem_to_hbm [thread:$0]  %s557, 256, %s555, %s542, 128, 128, 8
        $region40: #{tpu_custom_call.1} parent=31 // pred_fallthru
          _
      $region32: #{tpu_custom_call.1} parent=5 // pred_fallthru
        _
      %p563 = scmp.le.s32.totalorder 2, %s12
      // Predicated region
      $region41: #{tpu_custom_call.1} parent=5 // pred_check
        %p564 = pneg %p563
      $region42: #{tpu_custom_call.1} parent=5 // pred_check_branch
        %566 = sbr.rel (%p564) target = $region44
      $region43: #{tpu_custom_call.1} parent=5 // pred_region
        %s567 = ssub.s32 %s12, 2
        // Predicated region
        $region45: #{tpu_custom_call.1} parent=43 // pred_check
          %p568 = pneg %p133
        $region46: #{tpu_custom_call.1} parent=43 // pred_check_branch
          %570 = sbr.rel (%p568) target = $region48
        $region47: #{tpu_custom_call.1} parent=43 // pred_region
          %s571 = sand.u32 %s118, 1
          %s572 = scalar_lea.sflag [#allocation3], %s571
          %s573 = sand.u32 %s118, 1
          %s574 = smul.addr %s573, 16
          %s575 = scalar_lea.vmem [#allocation2], %s574
          %576 = dma.done %s572, 256
        $region48: #{tpu_custom_call.1} parent=43 // pred_fallthru
          _
      $region44: #{tpu_custom_call.1} parent=5 // pred_fallthru
        _
    $region6: #{tpu_custom_call.1} parent=1 // loop_footer
      %s16 = sadd.s32 1, %s12
    $region7: #{tpu_custom_call.1} parent=1 // loop_footer_branch
      %11 = sbr.rel target = $region3
    $region8: #{tpu_custom_call.1} parent=1 // loop_exit
      _
    %577 = vsyncpa [#allocation3], 1
    %s578 = scalar_lea.sflag [#allocation3], 1
    %579 = vsyncpa %s578, 1

</llo_original>
